<compile_context>
chip_gen: v5e
topology: v5e:2x2
jax: 0.10.0
libtpu: 0.0.40
codegen_flags: <defaults>
</compile_context>

<pallas_src>
import functools

import jax
import jax.numpy as jnp
from jax.experimental import pallas as pl
from jax.experimental.pallas import tpu as pltpu


def _inconv_kernel(x_ref, w_ref, b_ref, o_ref, *, cin, cout):
    """Fused 1x1 conv (BN folded) + ReLU on one (t1, s2) spatial tile.

    x_ref: (1, cin,  t1, s2)  VMEM tile (NCHW with spatial split into t1 x s2)
    w_ref: (cout, cin)        SMEM  BN-folded conv weight
    b_ref: (cout,)            SMEM  BN-folded bias
    o_ref: (1, cout, t1, s2)  VMEM output tile
    """
    for c in range(cout):
        acc = x_ref[0, 0] * w_ref[c, 0]
        for k in range(1, cin):
            acc = acc + x_ref[0, k] * w_ref[c, k]
        o_ref[0, c] = jnp.maximum(acc + b_ref[c], 0.0).astype(o_ref.dtype)


def _round_up(x, m):
    return (x + m - 1) // m * m


def inconv_pallas(x_nchw, w, b, gamma, beta, running_mean, running_var,
                  eps=1e-5, lane_tile=512, sublane_tile=128):
    """Fused Conv2d(k=1) + BatchNorm2d(inference) + ReLU, NCHW in / NCHW out.

    x_nchw: [B, Cin, H, W] float32
    w:      [Cout, Cin]    (PyTorch Conv2d weight squeezed over the 1x1 kernel)
    b, gamma, beta, running_mean, running_var: [Cout]
    returns [B, Cout, H, W] float32
    """
    B, cin, H, W = x_nchw.shape
    cout = w.shape[0]
    S = H * W

    # --- Fold BatchNorm (inference) into the conv weight/bias on the host ---
    inv = gamma.astype(jnp.float32) * jax.lax.rsqrt(running_var.astype(jnp.float32) + eps)
    w_fold = (w.astype(jnp.float32) * inv[:, None]).astype(jnp.float32)          # (cout, cin)
    b_fold = ((b.astype(jnp.float32) - running_mean) * inv + beta).astype(jnp.float32)  # (cout,)

    # --- Choose a lane-dense spatial tiling: spatial = s1 x s2, s2 on lanes ---
    s2 = lane_tile if S >= lane_tile else 128
    tile_elems = sublane_tile * s2
    if S <= tile_elems:
        s_pad = _round_up(S, s2)
        s1 = s_pad // s2
        t1 = s1                      # single spatial tile (t1 == full dim is legal)
    else:
        s_pad = _round_up(S, tile_elems)
        s1 = s_pad // s2
        t1 = sublane_tile            # multiple of 8

    # Pure reshape (NCHW stays NCHW); pad the flattened spatial axis if needed.
    x_flat = x_nchw.reshape(B, cin, S).astype(jnp.float32)
    if s_pad != S:
        x_flat = jnp.pad(x_flat, ((0, 0), (0, 0), (0, s_pad - S)))
    x4 = x_flat.reshape(B, cin, s1, s2)

    grid = (B, s1 // t1)
    kernel = functools.partial(_inconv_kernel, cin=cin, cout=cout)

    out4 = pl.pallas_call(
        kernel,
        out_shape=jax.ShapeDtypeStruct((B, cout, s1, s2), jnp.float32),
        grid_spec=pltpu.PrefetchScalarGridSpec(
            num_scalar_prefetch=0,
            grid=grid,
            in_specs=[
                pl.BlockSpec((1, cin, t1, s2), lambda bi, si: (bi, 0, si, 0)),
                pl.BlockSpec(memory_space=pltpu.MemorySpace.SMEM),   # w_fold
                pl.BlockSpec(memory_space=pltpu.MemorySpace.SMEM),   # b_fold
            ],
            out_specs=pl.BlockSpec((1, cout, t1, s2), lambda bi, si: (bi, 0, si, 0)),
        ),
        compiler_params=pltpu.CompilerParams(
            dimension_semantics=("parallel", "parallel")),
    )(x4, w_fold, b_fold)

    out = out4.reshape(B, cout, s_pad)
    if s_pad != S:
        out = out[:, :, :S]
    return out.reshape(B, cout, H, W)


class FasterRCNNPallas:
    """Mirror of the PyTorch FasterRCNN wrapper (inconv path in Pallas)."""

    def __init__(self, num_channels=4, num_classes=91, min_size=512, key=None):
        self.num_channels = num_channels
        self.num_classes = num_classes
        self.min_size = min_size
        self.has_inconv = num_channels != 3
        if self.has_inconv:
            key = jax.random.PRNGKey(42) if key is None else key
            kw, kb = jax.random.split(key)
            cout, cin = 3, num_channels
            # deterministic init mimicking PyTorch Conv2d default (+/- 1/sqrt(fan_in))
            bound = 1.0 / jnp.sqrt(float(cin))
            self.conv_w = jax.random.uniform(kw, (cout, cin), jnp.float32, -bound, bound)
            self.conv_b = jax.random.uniform(kb, (cout,), jnp.float32, -bound, bound)
            # BatchNorm2d default init (inference semantics)
            self.bn_gamma = jnp.ones((cout,), jnp.float32)
            self.bn_beta = jnp.zeros((cout,), jnp.float32)
            self.bn_mean = jnp.zeros((cout,), jnp.float32)
            self.bn_var = jnp.ones((cout,), jnp.float32)

    def __call__(self, x):
        if self.has_inconv:
            x = inconv_pallas(x, self.conv_w, self.conv_b, self.bn_gamma,
                              self.bn_beta, self.bn_mean, self.bn_var)
        # TODO(synk): self.body (fasterrcnn_resnet50_fpn) not implemented —
        # return the 3-channel feature map that would be fed to the detector.
        return x


def _reference(x_nchw, w, b, gamma, beta, mean, var):
    # pure-JAX reference (unfolded BN) for correctness check
    y = jnp.einsum('bchw,oc->bohw', x_nchw, w) + b[None, :, None, None]
    y = (y - mean[None, :, None, None]) * (
        gamma[None, :, None, None] * jax.lax.rsqrt(var[None, :, None, None] + 1e-5)
    ) + beta[None, :, None, None]
    return jnp.maximum(y, 0.0)


if __name__ == "__main__":
    key = jax.random.PRNGKey(0)
    B, C, H, W = 2, 4, 16, 16          # num_channels=4 != 3 -> inconv path active
    x = jax.random.normal(key, (B, C, H, W), jnp.float32)

    model = FasterRCNNPallas(num_channels=C, num_classes=91, min_size=512)
    out = jax.block_until_ready(model(x))

    ref = _reference(x, model.conv_w, model.conv_b, model.bn_gamma,
                     model.bn_beta, model.bn_mean, model.bn_var)
    assert out.shape == (B, 3, H, W)
    assert jnp.allclose(out, ref, atol=1e-5, rtol=1e-5)
    print("KERNEL_OK")
</pallas_src>

<mosaic_0001>
module attributes {stable_mosaic.version = 11 : i64} {
  func.func @_inconv_kernel(%arg0: i32, %arg1: i32, %arg2: memref<1x4x2x128xf32, #tpu.memory_space<vmem>>, %arg3: memref<3x4xf32, #tpu.memory_space<smem>>, %arg4: memref<3xf32, #tpu.memory_space<smem>>, %arg5: memref<1x3x2x128xf32, #tpu.memory_space<vmem>>) attributes {dimension_semantics = [#tpu.dimension_semantics<parallel>, #tpu.dimension_semantics<parallel>], iteration_bounds = array<i64: 2, 1>, scalar_prefetch = 0 : i64, scratch_operands = 0 : i64, tpu.core_type = #tpu.core_type<tc>, window_params = [{transform_indices = @transform_0, window_bounds = array<i64: 1, 4, 2, 128>}, {transform_indices = @transform_1, window_bounds = array<i64: 3, 4>}, {transform_indices = @transform_2, window_bounds = array<i64: 3>}, {transform_indices = @transform_3, window_bounds = array<i64: 1, 3, 2, 128>}]} {
    %c0 = arith.constant 0 : index
    %c0_0 = arith.constant 0 : index
    %c0_1 = arith.constant 0 : index
    %c0_2 = arith.constant 0 : index
    %0 = vector.load %arg2[%c0, %c0_0, %c0_1, %c0_2] : memref<1x4x2x128xf32, #tpu.memory_space<vmem>>, vector<1x1x2x128xf32>
    %1 = vector.shape_cast %0 : vector<1x1x2x128xf32> to vector<2x128xf32>
    %c0_3 = arith.constant 0 : index
    %c0_4 = arith.constant 0 : index
    %2 = memref.load %arg3[%c0_3, %c0_4] : memref<3x4xf32, #tpu.memory_space<smem>>
    %3 = vector.broadcast %2 : f32 to vector<2x128xf32>
    %4 = arith.mulf %1, %3 : vector<2x128xf32>
    %c0_5 = arith.constant 0 : index
    %c1 = arith.constant 1 : index
    %c0_6 = arith.constant 0 : index
    %c0_7 = arith.constant 0 : index
    %5 = vector.load %arg2[%c0_5, %c1, %c0_6, %c0_7] : memref<1x4x2x128xf32, #tpu.memory_space<vmem>>, vector<1x1x2x128xf32>
    %6 = vector.shape_cast %5 : vector<1x1x2x128xf32> to vector<2x128xf32>
    %c0_8 = arith.constant 0 : index
    %c1_9 = arith.constant 1 : index
    %7 = memref.load %arg3[%c0_8, %c1_9] : memref<3x4xf32, #tpu.memory_space<smem>>
    %8 = vector.broadcast %7 : f32 to vector<2x128xf32>
    %9 = arith.mulf %6, %8 : vector<2x128xf32>
    %10 = arith.addf %4, %9 : vector<2x128xf32>
    %c0_10 = arith.constant 0 : index
    %c2 = arith.constant 2 : index
    %c0_11 = arith.constant 0 : index
    %c0_12 = arith.constant 0 : index
    %11 = vector.load %arg2[%c0_10, %c2, %c0_11, %c0_12] : memref<1x4x2x128xf32, #tpu.memory_space<vmem>>, vector<1x1x2x128xf32>
    %12 = vector.shape_cast %11 : vector<1x1x2x128xf32> to vector<2x128xf32>
    %c0_13 = arith.constant 0 : index
    %c2_14 = arith.constant 2 : index
    %13 = memref.load %arg3[%c0_13, %c2_14] : memref<3x4xf32, #tpu.memory_space<smem>>
    %14 = vector.broadcast %13 : f32 to vector<2x128xf32>
    %15 = arith.mulf %12, %14 : vector<2x128xf32>
    %16 = arith.addf %10, %15 : vector<2x128xf32>
    %c0_15 = arith.constant 0 : index
    %c3 = arith.constant 3 : index
    %c0_16 = arith.constant 0 : index
    %c0_17 = arith.constant 0 : index
    %17 = vector.load %arg2[%c0_15, %c3, %c0_16, %c0_17] : memref<1x4x2x128xf32, #tpu.memory_space<vmem>>, vector<1x1x2x128xf32>
    %18 = vector.shape_cast %17 : vector<1x1x2x128xf32> to vector<2x128xf32>
    %c0_18 = arith.constant 0 : index
    %c3_19 = arith.constant 3 : index
    %19 = memref.load %arg3[%c0_18, %c3_19] : memref<3x4xf32, #tpu.memory_space<smem>>
    %20 = vector.broadcast %19 : f32 to vector<2x128xf32>
    %21 = arith.mulf %18, %20 : vector<2x128xf32>
    %22 = arith.addf %16, %21 : vector<2x128xf32>
    %c0_20 = arith.constant 0 : index
    %23 = memref.load %arg4[%c0_20] : memref<3xf32, #tpu.memory_space<smem>>
    %24 = vector.broadcast %23 : f32 to vector<2x128xf32>
    %25 = arith.addf %22, %24 : vector<2x128xf32>
    %cst = arith.constant 0.000000e+00 : f32
    %26 = vector.broadcast %cst : f32 to vector<2x128xf32>
    %27 = arith.maximumf %25, %26 : vector<2x128xf32>
    %c0_21 = arith.constant 0 : index
    %c0_22 = arith.constant 0 : index
    %c0_23 = arith.constant 0 : index
    %c0_24 = arith.constant 0 : index
    %28 = vector.load %arg5[%c0_21, %c0_22, %c0_23, %c0_24] : memref<1x3x2x128xf32, #tpu.memory_space<vmem>>, vector<1x1x2x128xf32>
    %29 = vector.shape_cast %28 : vector<1x1x2x128xf32> to vector<2x128xf32>
    %30 = vector.shape_cast %27 : vector<2x128xf32> to vector<1x1x2x128xf32>
    tpu.vector_store %arg5[%c0_21, %c0_22, %c0_23, %c0_24], %30 {strides = array<i32>} : memref<1x3x2x128xf32, #tpu.memory_space<vmem>>, vector<1x1x2x128xf32>,
    %c0_25 = arith.constant 0 : index
    %c0_26 = arith.constant 0 : index
    %c0_27 = arith.constant 0 : index
    %c0_28 = arith.constant 0 : index
    %31 = vector.load %arg2[%c0_25, %c0_26, %c0_27, %c0_28] : memref<1x4x2x128xf32, #tpu.memory_space<vmem>>, vector<1x1x2x128xf32>
    %32 = vector.shape_cast %31 : vector<1x1x2x128xf32> to vector<2x128xf32>
    %c1_29 = arith.constant 1 : index
    %c0_30 = arith.constant 0 : index
    %33 = memref.load %arg3[%c1_29, %c0_30] : memref<3x4xf32, #tpu.memory_space<smem>>
    %34 = vector.broadcast %33 : f32 to vector<2x128xf32>
    %35 = arith.mulf %32, %34 : vector<2x128xf32>
    %c0_31 = arith.constant 0 : index
    %c1_32 = arith.constant 1 : index
    %c0_33 = arith.constant 0 : index
    %c0_34 = arith.constant 0 : index
    %36 = vector.load %arg2[%c0_31, %c1_32, %c0_33, %c0_34] : memref<1x4x2x128xf32, #tpu.memory_space<vmem>>, vector<1x1x2x128xf32>
    %37 = vector.shape_cast %36 : vector<1x1x2x128xf32> to vector<2x128xf32>
    %c1_35 = arith.constant 1 : index
    %c1_36 = arith.constant 1 : index
    %38 = memref.load %arg3[%c1_35, %c1_36] : memref<3x4xf32, #tpu.memory_space<smem>>
    %39 = vector.broadcast %38 : f32 to vector<2x128xf32>
    %40 = arith.mulf %37, %39 : vector<2x128xf32>
    %41 = arith.addf %35, %40 : vector<2x128xf32>
    %c0_37 = arith.constant 0 : index
    %c2_38 = arith.constant 2 : index
    %c0_39 = arith.constant 0 : index
    %c0_40 = arith.constant 0 : index
    %42 = vector.load %arg2[%c0_37, %c2_38, %c0_39, %c0_40] : memref<1x4x2x128xf32, #tpu.memory_space<vmem>>, vector<1x1x2x128xf32>
    %43 = vector.shape_cast %42 : vector<1x1x2x128xf32> to vector<2x128xf32>
    %c1_41 = arith.constant 1 : index
    %c2_42 = arith.constant 2 : index
    %44 = memref.load %arg3[%c1_41, %c2_42] : memref<3x4xf32, #tpu.memory_space<smem>>
    %45 = vector.broadcast %44 : f32 to vector<2x128xf32>
    %46 = arith.mulf %43, %45 : vector<2x128xf32>
    %47 = arith.addf %41, %46 : vector<2x128xf32>
    %c0_43 = arith.constant 0 : index
    %c3_44 = arith.constant 3 : index
    %c0_45 = arith.constant 0 : index
    %c0_46 = arith.constant 0 : index
    %48 = vector.load %arg2[%c0_43, %c3_44, %c0_45, %c0_46] : memref<1x4x2x128xf32, #tpu.memory_space<vmem>>, vector<1x1x2x128xf32>
    %49 = vector.shape_cast %48 : vector<1x1x2x128xf32> to vector<2x128xf32>
    %c1_47 = arith.constant 1 : index
    %c3_48 = arith.constant 3 : index
    %50 = memref.load %arg3[%c1_47, %c3_48] : memref<3x4xf32, #tpu.memory_space<smem>>
    %51 = vector.broadcast %50 : f32 to vector<2x128xf32>
    %52 = arith.mulf %49, %51 : vector<2x128xf32>
    %53 = arith.addf %47, %52 : vector<2x128xf32>
    %c1_49 = arith.constant 1 : index
    %54 = memref.load %arg4[%c1_49] : memref<3xf32, #tpu.memory_space<smem>>
    %55 = vector.broadcast %54 : f32 to vector<2x128xf32>
    %56 = arith.addf %53, %55 : vector<2x128xf32>
    %cst_50 = arith.constant 0.000000e+00 : f32
    %57 = vector.broadcast %cst_50 : f32 to vector<2x128xf32>
    %58 = arith.maximumf %56, %57 : vector<2x128xf32>
    %c0_51 = arith.constant 0 : index
    %c1_52 = arith.constant 1 : index
    %c0_53 = arith.constant 0 : index
    %c0_54 = arith.constant 0 : index
    %59 = vector.load %arg5[%c0_51, %c1_52, %c0_53, %c0_54] : memref<1x3x2x128xf32, #tpu.memory_space<vmem>>, vector<1x1x2x128xf32>
    %60 = vector.shape_cast %59 : vector<1x1x2x128xf32> to vector<2x128xf32>
    %61 = vector.shape_cast %58 : vector<2x128xf32> to vector<1x1x2x128xf32>
    tpu.vector_store %arg5[%c0_51, %c1_52, %c0_53, %c0_54], %61 {strides = array<i32>} : memref<1x3x2x128xf32, #tpu.memory_space<vmem>>, vector<1x1x2x128xf32>,
    %c0_55 = arith.constant 0 : index
    %c0_56 = arith.constant 0 : index
    %c0_57 = arith.constant 0 : index
    %c0_58 = arith.constant 0 : index
    %62 = vector.load %arg2[%c0_55, %c0_56, %c0_57, %c0_58] : memref<1x4x2x128xf32, #tpu.memory_space<vmem>>, vector<1x1x2x128xf32>
    %63 = vector.shape_cast %62 : vector<1x1x2x128xf32> to vector<2x128xf32>
    %c2_59 = arith.constant 2 : index
    %c0_60 = arith.constant 0 : index
    %64 = memref.load %arg3[%c2_59, %c0_60] : memref<3x4xf32, #tpu.memory_space<smem>>
    %65 = vector.broadcast %64 : f32 to vector<2x128xf32>
    %66 = arith.mulf %63, %65 : vector<2x128xf32>
    %c0_61 = arith.constant 0 : index
    %c1_62 = arith.constant 1 : index
    %c0_63 = arith.constant 0 : index
    %c0_64 = arith.constant 0 : index
    %67 = vector.load %arg2[%c0_61, %c1_62, %c0_63, %c0_64] : memref<1x4x2x128xf32, #tpu.memory_space<vmem>>, vector<1x1x2x128xf32>
    %68 = vector.shape_cast %67 : vector<1x1x2x128xf32> to vector<2x128xf32>
    %c2_65 = arith.constant 2 : index
    %c1_66 = arith.constant 1 : index
    %69 = memref.load %arg3[%c2_65, %c1_66] : memref<3x4xf32, #tpu.memory_space<smem>>
    %70 = vector.broadcast %69 : f32 to vector<2x128xf32>
    %71 = arith.mulf %68, %70 : vector<2x128xf32>
    %72 = arith.addf %66, %71 : vector<2x128xf32>
    %c0_67 = arith.constant 0 : index
    %c2_68 = arith.constant 2 : index
    %c0_69 = arith.constant 0 : index
    %c0_70 = arith.constant 0 : index
    %73 = vector.load %arg2[%c0_67, %c2_68, %c0_69, %c0_70] : memref<1x4x2x128xf32, #tpu.memory_space<vmem>>, vector<1x1x2x128xf32>
    %74 = vector.shape_cast %73 : vector<1x1x2x128xf32> to vector<2x128xf32>
    %c2_71 = arith.constant 2 : index
    %c2_72 = arith.constant 2 : index
    %75 = memref.load %arg3[%c2_71, %c2_72] : memref<3x4xf32, #tpu.memory_space<smem>>
    %76 = vector.broadcast %75 : f32 to vector<2x128xf32>
    %77 = arith.mulf %74, %76 : vector<2x128xf32>
    %78 = arith.addf %72, %77 : vector<2x128xf32>
    %c0_73 = arith.constant 0 : index
    %c3_74 = arith.constant 3 : index
    %c0_75 = arith.constant 0 : index
    %c0_76 = arith.constant 0 : index
    %79 = vector.load %arg2[%c0_73, %c3_74, %c0_75, %c0_76] : memref<1x4x2x128xf32, #tpu.memory_space<vmem>>, vector<1x1x2x128xf32>
    %80 = vector.shape_cast %79 : vector<1x1x2x128xf32> to vector<2x128xf32>
    %c2_77 = arith.constant 2 : index
    %c3_78 = arith.constant 3 : index
    %81 = memref.load %arg3[%c2_77, %c3_78] : memref<3x4xf32, #tpu.memory_space<smem>>
    %82 = vector.broadcast %81 : f32 to vector<2x128xf32>
    %83 = arith.mulf %80, %82 : vector<2x128xf32>
    %84 = arith.addf %78, %83 : vector<2x128xf32>
    %c2_79 = arith.constant 2 : index
    %85 = memref.load %arg4[%c2_79] : memref<3xf32, #tpu.memory_space<smem>>
    %86 = vector.broadcast %85 : f32 to vector<2x128xf32>
    %87 = arith.addf %84, %86 : vector<2x128xf32>
    %cst_80 = arith.constant 0.000000e+00 : f32
    %88 = vector.broadcast %cst_80 : f32 to vector<2x128xf32>
    %89 = arith.maximumf %87, %88 : vector<2x128xf32>
    %c0_81 = arith.constant 0 : index
    %c2_82 = arith.constant 2 : index
    %c0_83 = arith.constant 0 : index
    %c0_84 = arith.constant 0 : index
    %90 = vector.load %arg5[%c0_81, %c2_82, %c0_83, %c0_84] : memref<1x3x2x128xf32, #tpu.memory_space<vmem>>, vector<1x1x2x128xf32>
    %91 = vector.shape_cast %90 : vector<1x1x2x128xf32> to vector<2x128xf32>
    %92 = vector.shape_cast %89 : vector<2x128xf32> to vector<1x1x2x128xf32>
    tpu.vector_store %arg5[%c0_81, %c2_82, %c0_83, %c0_84], %92 {strides = array<i32>} : memref<1x3x2x128xf32, #tpu.memory_space<vmem>>, vector<1x1x2x128xf32>,
    return
  }
  func.func @transform_0(%arg0: i32, %arg1: i32) -> (i32, i32, i32, i32) {
    %c0_i32 = arith.constant 0 : i32
    %c0_i32_0 = arith.constant 0 : i32
    %c0_i32_1 = arith.constant 0 : i32
    return %arg0, %c0_i32, %arg1, %c0_i32_0 : i32, i32, i32, i32
  }
  func.func @transform_1(%arg0: i32, %arg1: i32) -> (i32, i32) {
    %c0_i32 = arith.constant 0 : i32
    %c0_i32_0 = arith.constant 0 : i32
    %c0_i32_1 = arith.constant 0 : i32
    return %c0_i32, %c0_i32_0 : i32, i32
  }
  func.func @transform_2(%arg0: i32, %arg1: i32) -> i32 {
    %c0_i32 = arith.constant 0 : i32
    %c0_i32_0 = arith.constant 0 : i32
    return %c0_i32 : i32
  }
  func.func @transform_3(%arg0: i32, %arg1: i32) -> (i32, i32, i32, i32) {
    %c0_i32 = arith.constant 0 : i32
    %c0_i32_0 = arith.constant 0 : i32
    %c0_i32_1 = arith.constant 0 : i32
    return %arg0, %c0_i32, %arg1, %c0_i32_0 : i32, i32, i32, i32
  }
}

</mosaic_0001>

<llo_original>
// kernel: tpu_custom_call.1
$region0: #{tpu_custom_call.1}
  #allocation0 [shape = 'u32[]', space=smem, size = 0x4, offset = 0x4, fixed_abs, tag = 'smem constant byte address 0x4 - core index']
  #allocation1 [shape = 'u32[72,128]{1,0:T(1,128)}', space=vmem, size = 0x9000, scoped, tag = 'internal scratch']
  %s0 = inlined_call_operand.hbm [shape: f32[2,4,2,128], index: 0, kind: input, shape index: {}]
  %s1 = inlined_call_operand.hbm [shape: f32[3,4], index: 1, kind: input, shape index: {}]
  %s2 = inlined_call_operand.vmem [shape: f32[3], index: 2, kind: input, shape index: {}]
  %s3 = inlined_call_operand.hbm [shape: f32[2,3,2,128], index: 3, kind: output, shape index: {}]
  %s4 = sld [smem:[#allocation0]]
  $region57: #{tpu_custom_call.1} parent=0
    _
  %s6 = ssub.s32 1, %s4
  %s7 = scalar_select 0, %s6, %s4
  $region1: #{tpu_custom_call.1} parent=0
    #allocation2 [shape = 'u8[8192]{0}', space=vmem, size = 0x2000, scoped, tag = 'input window, operand 0']
    #allocation3 [shape = 's32[2]{0}', space=sflag, size = 0x8, scoped, tag = 'scoped memory for tpu_custom_call.1']
    #allocation4 [shape = 's32[2]{0}', space=sflag, size = 0x8, scoped, tag = 'scoped memory for tpu_custom_call.1']
    #allocation5 [shape = 's32[2]{0}', space=sflag, size = 0x8, scoped, tag = 'scoped memory for tpu_custom_call.1']
    #allocation6 [shape = 's32[2]{0}', space=sflag, size = 0x8, scoped, tag = 'scoped memory for tpu_custom_call.1']
    #allocation7 [shape = 'u8[2048]{0}', space=smem, size = 0x800, scoped, tag = 'input window, operand 1, single buffered']
    #allocation8 [shape = 'u8[512]{0}', space=smem, size = 0x200, scoped, tag = 'input window, operand 2, single buffered']
    #allocation9 [shape = 'u8[6144]{0}', space=vmem, size = 0x1800, scoped, tag = 'output window, operand 0']
    %8 = vsyncpa [#allocation3], 0
    %s9 = scalar_lea.sflag [#allocation3], 1
    %10 = vsyncpa %s9, 0
    %11 = vsyncpa [#allocation5], 0
    %12 = vsyncpa [#allocation6], 0
    %13 = vsyncpa [#allocation4], 0
    %s14 = scalar_lea.sflag [#allocation4], 1
    %15 = vsyncpa %s14, 0
    loop: start=0, step=1, limit=4
    $region2: #{tpu_custom_call.1} parent=1 // loop_pre_header
      _
    $region3: #{tpu_custom_call.1} parent=1 // loop_header
      %s17 = sphi 0, %s21
      %p18 = scmp.ge.s32.totalorder %s17, 4
      %s24 = sphi 0, %s36
      %s25 = sphi 0, %s32
      %s26 = sphi 0, %s24
      %s27 = sphi 0, %s25
      %s28 = sphi 0, %s26
      %s29 = sphi 0, %s27
      %s41 = sphi 0, %s43
      %s44 = sphi 0, %s41
      %s45 = sphi 0, %s44
      %s61 = sphi 0, %s45
      %s65 = sphi 0, %s65
      %s67 = sphi 0, %s65
      %s68 = sphi 0, %s67
      %s82 = sphi 0, %s68
      %s86 = sphi 0, %s86
      %s88 = sphi 0, %s86
      %s89 = sphi 0, %s88
      %s103 = sphi 0, %s89
      %s111 = sphi 0, %s113
      %s114 = sphi 0, %s111
      %s115 = sphi 0, %s114
      %s131 = sphi 0, %s115
    $region4: #{tpu_custom_call.1} parent=1 // loop_header_branch
      %20 = sbr.rel (%p18) target = $region8
    $region5: #{tpu_custom_call.1} parent=1 // loop_body
      %s22 = ssub.s32 %s17, 1
      %s23 = ssub.s32 %s17, 2
      %s30 = sadd.s32 1, %s25
      %p31 = scmp.ge.s32.totalorder %s30, 1
      %s32 = scalar_select %p31, 0, %s30
      %s33 = sadd.s32 1, %s24
      %s34 = scalar_select %p31, %s33, %s24
      %p35 = scmp.ge.s32.totalorder %s34, 2
      %s36 = scalar_select %p35, 0, %s34
      %s37 = ssub.s32 %s24, %s36
      %s38 = ssub.s32 %s25, %s32
      %s39 = sor.u32 %s37, %s38
      %p40 = scmp.eq.s32.totalorder %s39, 0
      %s42 = sadd.s32 %s41, 1
      %s43 = scalar_select %p40, %s41, %s42
      %p46 = pneg %p40
      %p47 = scmp.eq.s32.totalorder %s17, 1
      %p48 = por %p46, %p47
      %p49 = scmp.ne.s32.totalorder %s41, %s44
      %p50 = scmp.eq.s32.totalorder %s17, 0
      %p51 = por %p49, %p50
      %p52 = scmp.ne.s32.totalorder %s41, %s44
      %p53 = scmp.eq.s32.totalorder %s22, 1
      %p54 = por %p52, %p53
      %p55 = scmp.ne.s32.totalorder %s44, %s45
      %p56 = scmp.eq.s32.totalorder %s22, 0
      %p57 = por %p55, %p56
      %p58 = scmp.ne.s32.totalorder %s44, %s45
      %p59 = scmp.eq.s32.totalorder %s23, 1
      %p60 = por %p58, %p59
      %p62 = scmp.ne.s32.totalorder %s45, %s61
      %p63 = scmp.eq.s32.totalorder %s23, 0
      %p64 = por %p62, %p63
      %s66 = sadd.s32 %s65, 1
      %p69 = scmp.eq.s32.totalorder %s17, 1
      %p70 = scmp.ne.s32.totalorder %s65, %s67
      %p71 = scmp.eq.s32.totalorder %s17, 0
      %p72 = por %p70, %p71
      %p73 = scmp.ne.s32.totalorder %s65, %s67
      %p74 = scmp.eq.s32.totalorder %s22, 1
      %p75 = por %p73, %p74
      %p76 = scmp.ne.s32.totalorder %s67, %s68
      %p77 = scmp.eq.s32.totalorder %s22, 0
      %p78 = por %p76, %p77
      %p79 = scmp.ne.s32.totalorder %s67, %s68
      %p80 = scmp.eq.s32.totalorder %s23, 1
      %p81 = por %p79, %p80
      %p83 = scmp.ne.s32.totalorder %s68, %s82
      %p84 = scmp.eq.s32.totalorder %s23, 0
      %p85 = por %p83, %p84
      %s87 = sadd.s32 %s86, 1
      %p90 = scmp.eq.s32.totalorder %s17, 1
      %p91 = scmp.ne.s32.totalorder %s86, %s88
      %p92 = scmp.eq.s32.totalorder %s17, 0
      %p93 = por %p91, %p92
      %p94 = scmp.ne.s32.totalorder %s86, %s88
      %p95 = scmp.eq.s32.totalorder %s22, 1
      %p96 = por %p94, %p95
      %p97 = scmp.ne.s32.totalorder %s88, %s89
      %p98 = scmp.eq.s32.totalorder %s22, 0
      %p99 = por %p97, %p98
      %p100 = scmp.ne.s32.totalorder %s88, %s89
      %p101 = scmp.eq.s32.totalorder %s23, 1
      %p102 = por %p100, %p101
      %p104 = scmp.ne.s32.totalorder %s89, %s103
      %p105 = scmp.eq.s32.totalorder %s23, 0
      %p106 = por %p104, %p105
      %s107 = ssub.s32 %s24, %s36
      %s108 = ssub.s32 %s25, %s32
      %s109 = sor.u32 %s107, %s108
      %p110 = scmp.eq.s32.totalorder %s109, 0
      %s112 = sadd.s32 %s111, 1
      %s113 = scalar_select %p110, %s111, %s112
      %p116 = pneg %p110
      %p117 = scmp.eq.s32.totalorder %s17, 1
      %p118 = por %p116, %p117
      %p119 = scmp.ne.s32.totalorder %s111, %s114
      %p120 = scmp.eq.s32.totalorder %s17, 0
      %p121 = por %p119, %p120
      %p122 = scmp.ne.s32.totalorder %s111, %s114
      %p123 = scmp.eq.s32.totalorder %s22, 1
      %p124 = por %p122, %p123
      %p125 = scmp.ne.s32.totalorder %s114, %s115
      %p126 = scmp.eq.s32.totalorder %s22, 0
      %p127 = por %p125, %p126
      %p128 = scmp.ne.s32.totalorder %s114, %s115
      %p129 = scmp.eq.s32.totalorder %s23, 1
      %p130 = por %p128, %p129
      %p132 = scmp.ne.s32.totalorder %s115, %s131
      %p133 = scmp.eq.s32.totalorder %s23, 0
      %p134 = por %p132, %p133
      %p135 = scmp.le.s32.totalorder 1, %s17
      %p136 = scmp.lt.s32.totalorder %s17, 3
      %p137 = pnand %p135, %p136
      %p138 = pneg %p137
      // Predicated region
      $region9: #{tpu_custom_call.1} parent=5 // pred_check
        _
      $region10: #{tpu_custom_call.1} parent=5 // pred_check_branch
        %140 = sbr.rel (%p137) target = $region12
      $region11: #{tpu_custom_call.1} parent=5 // pred_region
        %s141 = ssub.s32 %s17, 1
        // Predicated region
        $region13: #{tpu_custom_call.1} parent=11 // pred_check
          %p142 = pneg %p78
        $region14: #{tpu_custom_call.1} parent=11 // pred_check_branch
          %144 = sbr.rel (%p142) target = $region16
        $region15: #{tpu_custom_call.1} parent=11 // pred_region
          %146 = vsyncadd [#allocation5], 0
          %s148 = sshll.u32 %s1, 4
          %s149 = int_to_ptr.hbm [resolvable:$true] %s148
          %151 = dma.hbm_to_smem %s149, 64, [#allocation7], [#allocation5]
        $region16: #{tpu_custom_call.1} parent=11 // pred_fallthru
          _
        // Predicated region
        $region17: #{tpu_custom_call.1} parent=11 // pred_check
          %p152 = pneg %p99
        $region18: #{tpu_custom_call.1} parent=11 // pred_check_branch
          %154 = sbr.rel (%p152) target = $region20
        $region19: #{tpu_custom_call.1} parent=11 // pred_region
          %156 = vsyncadd [#allocation6], 0
          %s158 = sshll.u32 %s2, 4
          %s159 = int_to_ptr.vmem [resolvable:$true] %s158
          %161 = dma.vmem_to_smem %s159, 16, [#allocation8], [#allocation6]
        $region20: #{tpu_custom_call.1} parent=11 // pred_fallthru
          _
      $region12: #{tpu_custom_call.1} parent=5 // pred_fallthru
        _
      %p162 = scmp.lt.s32.totalorder %s17, 2
      // Predicated region
      $region21: #{tpu_custom_call.1} parent=5 // pred_check
        %p163 = pneg %p162
      $region22: #{tpu_custom_call.1} parent=5 // pred_check_branch
        %165 = sbr.rel (%p163) target = $region24
      $region23: #{tpu_custom_call.1} parent=5 // pred_region
        // Predicated region
        $region25: #{tpu_custom_call.1} parent=23 // pred_check
          %p166 = pneg %p51
        $region26: #{tpu_custom_call.1} parent=23 // pred_check_branch
          %168 = sbr.rel (%p166) target = $region28
        $region27: #{tpu_custom_call.1} parent=23 // pred_region
          %s169 = sand.u32 %s41, 1
          %s170 = scalar_lea.sflag [#allocation3], %s169
          %s171 = sand.u32 %s41, 1
          %s172 = smul.addr %s171, 8
          %s173 = scalar_lea.vmem [#allocation2], %s172
          %175 = vsyncadd %s170, 0
          %s176 = smul.addr %s24, 4
          %s177 = sadd.s32 %s25, %s176
          %s178 = smul.addr %s177, 2
          %s179 = scalar_lea.hbm %s0, %s178
          %s180 = sshll.u32 %s179, 4
          %s181 = int_to_ptr.hbm [resolvable:$true] %s180
          %s182 = sshll.u32 %s173, 4
          %s183 = int_to_ptr.vmem [resolvable:$true] %s182
          %188 = dma.hbm_to_vmem [thread:$0]  %s181, 128, %s183, %s170, 32, 32, 2
        $region28: #{tpu_custom_call.1} parent=23 // pred_fallthru
          _
      $region24: #{tpu_custom_call.1} parent=5 // pred_fallthru
        _
      %p189 = scmp.le.s32.totalorder 1, %s17
      %p190 = scmp.lt.s32.totalorder %s17, 3
      %p191 = pnand %p189, %p190
      %p192 = pneg %p191
      // Predicated region
      $region29: #{tpu_custom_call.1} parent=5 // pred_check
        _
      $region30: #{tpu_custom_call.1} parent=5 // pred_check_branch
        %194 = sbr.rel (%p191) target = $region32
      $region31: #{tpu_custom_call.1} parent=5 // pred_region
        %s195 = ssub.s32 %s17, 1
        %s196 = sand.u32 %s44, 1
        %s197 = scalar_lea.sflag [#allocation3], %s196
        %s198 = sand.u32 %s44, 1
        %s199 = smul.addr %s198, 8
        %s200 = scalar_lea.vmem [#allocation2], %s199
        // Predicated region
        $region33: #{tpu_custom_call.1} parent=31 // pred_check
          %p201 = pneg %p57
        $region34: #{tpu_custom_call.1} parent=31 // pred_check_branch
          %203 = sbr.rel (%p201) target = $region36
        $region35: #{tpu_custom_call.1} parent=31 // pred_region
          %205 = dma.done %s197, 128
        $region36: #{tpu_custom_call.1} parent=31 // pred_fallthru
          _
        // Predicated region
        $region37: #{tpu_custom_call.1} parent=31 // pred_check
          %p206 = pneg %p78
        $region38: #{tpu_custom_call.1} parent=31 // pred_check_branch
          %208 = sbr.rel (%p206) target = $region40
        $region39: #{tpu_custom_call.1} parent=31 // pred_region
          %210 = dma.done [#allocation5], 64
        $region40: #{tpu_custom_call.1} parent=31 // pred_fallthru
          _
        // Predicated region
        $region41: #{tpu_custom_call.1} parent=31 // pred_check
          %p211 = pneg %p99
        $region42: #{tpu_custom_call.1} parent=31 // pred_check_branch
          %213 = sbr.rel (%p211) target = $region44
        $region43: #{tpu_custom_call.1} parent=31 // pred_region
          %215 = dma.done [#allocation6], 16
        $region44: #{tpu_custom_call.1} parent=31 // pred_fallthru
          _
        %216 = sfence
        %s217 = sand.u32 %s44, 1
        %s218 = scalar_lea.sflag [#allocation3], %s217
        %s219 = sand.u32 %s44, 1
        %s220 = smul.addr %s219, 8
        %s221 = scalar_lea.vmem [#allocation2], %s220
        %p222 = pneg %p57
        %p223 = pneg %p54
        %p224 = pneg %p78
        %p225 = pneg %p75
        %p226 = pneg %p99
        %p227 = pneg %p96
        %p228 = pneg %p127
        %p229 = pneg %p124
        %s230 = sand.u32 %s114, 1
        %s231 = scalar_lea.sflag [#allocation4], %s230
        %s232 = sand.u32 %s114, 1
        %s233 = smul.addr %s232, 6
        %s234 = scalar_lea.vmem [#allocation9], %s233
        %v235 = vld [vmem:[%s200] sm:$0x3]
        %s236 = sld [smem:[#allocation7]]
        %v237 = vstv %s236
        %v238 = vmul.f32 %v235, %v237
        %s239 = scalar_lea.vmem %s200, 2 [#allocation2]
        %v240 = vld [vmem:[%s239] sm:$0x3]
        %s241 = sld [smem:[#allocation7 + $0x1]]
        %v242 = vstv %s241
        %v243 = vmul.f32 %v240, %v242
        %v244 = vadd.f32 %v238, %v243
        %s245 = scalar_lea.vmem %s200, 4 [#allocation2]
        %v246 = vld [vmem:[%s245] sm:$0x3]
        %s247 = sld [smem:[#allocation7 + $0x2]]
        %v248 = vstv %s247
        %v249 = vmul.f32 %v246, %v248
        %v250 = vadd.f32 %v244, %v249
        %s251 = scalar_lea.vmem %s200, 6 [#allocation2]
        %v252 = vld [vmem:[%s251] sm:$0x3]
        %s253 = sld [smem:[#allocation7 + $0x3]]
        %v254 = vstv %s253
        %v255 = vmul.f32 %v252, %v254
        %v256 = vadd.f32 %v250, %v255
        %s257 = sld [smem:[#allocation8]]
        %v258 = vstv %s257
        %v259 = vadd.f32 %v256, %v258
        %v260 = vmax.f32 %v259, 0.0
        %261 = vst [vmem:[%s234] sm:$0x3] %v260
        %v262 = vld [vmem:[%s200] sm:$0x3]
        %s263 = sld [smem:[#allocation7 + $0x80]]
        %v264 = vstv %s263
        %v265 = vmul.f32 %v262, %v264
        %v266 = vld [vmem:[%s239] sm:$0x3]
        %s267 = sld [smem:[#allocation7 + $0x81]]
        %v268 = vstv %s267
        %v269 = vmul.f32 %v266, %v268
        %v270 = vadd.f32 %v265, %v269
        %v271 = vld [vmem:[%s245] sm:$0x3]
        %s272 = sld [smem:[#allocation7 + $0x82]]
        %v273 = vstv %s272
        %v274 = vmul.f32 %v271, %v273
        %v275 = vadd.f32 %v270, %v274
        %v276 = vld [vmem:[%s251] sm:$0x3]
        %s277 = sld [smem:[#allocation7 + $0x83]]
        %v278 = vstv %s277
        %v279 = vmul.f32 %v276, %v278
        %v280 = vadd.f32 %v275, %v279
        %s281 = sld [smem:[#allocation8 + $0x1]]
        %v282 = vstv %s281
        %v283 = vadd.f32 %v280, %v282
        %v284 = vmax.f32 %v283, 0.0
        %s285 = scalar_lea.vmem %s234, 2 [#allocation9]
        %286 = vst [vmem:[%s285] sm:$0x3] %v284
        %v287 = vld [vmem:[%s200] sm:$0x3]
        %s288 = sld [smem:[#allocation7 + $0x100]]
        %v289 = vstv %s288
        %v290 = vmul.f32 %v287, %v289
        %v291 = vld [vmem:[%s239] sm:$0x3]
        %s292 = sld [smem:[#allocation7 + $0x101]]
        %v293 = vstv %s292
        %v294 = vmul.f32 %v291, %v293
        %v295 = vadd.f32 %v290, %v294
        %v296 = vld [vmem:[%s245] sm:$0x3]
        %s297 = sld [smem:[#allocation7 + $0x102]]
        %v298 = vstv %s297
        %v299 = vmul.f32 %v296, %v298
        %v300 = vadd.f32 %v295, %v299
        %v301 = vld [vmem:[%s251] sm:$0x3]
        %s302 = sld [smem:[#allocation7 + $0x103]]
        %v303 = vstv %s302
        %v304 = vmul.f32 %v301, %v303
        %v305 = vadd.f32 %v300, %v304
        %s306 = sld [smem:[#allocation8 + $0x2]]
        %v307 = vstv %s306
        %v308 = vadd.f32 %v305, %v307
        %v309 = vmax.f32 %v308, 0.0
        %s310 = scalar_lea.vmem %s234, 4 [#allocation9]
        %311 = vst [vmem:[%s310] sm:$0x3] %v309
        %s312 = sand.u32 %s114, 1
        %s313 = scalar_lea.sflag [#allocation4], %s312
        %s314 = sand.u32 %s114, 1
        %s315 = smul.addr %s314, 6
        %s316 = scalar_lea.vmem [#allocation9], %s315
        // Predicated region
        $region45: #{tpu_custom_call.1} parent=31 // pred_check
          %p317 = pneg %p124
        $region46: #{tpu_custom_call.1} parent=31 // pred_check_branch
          %319 = sbr.rel (%p317) target = $region48
        $region47: #{tpu_custom_call.1} parent=31 // pred_region
          %321 = vsyncadd %s313, 0
          %s322 = smul.addr %s26, 3
          %s323 = sadd.s32 %s27, %s322
          %s324 = smul.addr %s323, 2
          %s325 = scalar_lea.hbm %s3, %s324
          %s326 = sshll.u32 %s316, 4
          %s327 = int_to_ptr.vmem [resolvable:$true] %s326
          %s328 = sshll.u32 %s325, 4
          %s329 = int_to_ptr.hbm [resolvable:$true] %s328
          %334 = dma.vmem_to_hbm [thread:$0]  %s327, 96, %s329, %s313, 32, 32, 2
        $region48: #{tpu_custom_call.1} parent=31 // pred_fallthru
          _
      $region32: #{tpu_custom_call.1} parent=5 // pred_fallthru
        _
      %p335 = scmp.le.s32.totalorder 2, %s17
      // Predicated region
      $region49: #{tpu_custom_call.1} parent=5 // pred_check
        %p336 = pneg %p335
      $region50: #{tpu_custom_call.1} parent=5 // pred_check_branch
        %338 = sbr.rel (%p336) target = $region52
      $region51: #{tpu_custom_call.1} parent=5 // pred_region
        %s339 = ssub.s32 %s17, 2
        // Predicated region
        $region53: #{tpu_custom_call.1} parent=51 // pred_check
          %p340 = pneg %p130
        $region54: #{tpu_custom_call.1} parent=51 // pred_check_branch
          %342 = sbr.rel (%p340) target = $region56
        $region55: #{tpu_custom_call.1} parent=51 // pred_region
          %s343 = sand.u32 %s115, 1
          %s344 = scalar_lea.sflag [#allocation4], %s343
          %s345 = sand.u32 %s115, 1
          %s346 = smul.addr %s345, 6
          %s347 = scalar_lea.vmem [#allocation9], %s346
          %349 = dma.done %s344, 96
        $region56: #{tpu_custom_call.1} parent=51 // pred_fallthru
          _
      $region52: #{tpu_custom_call.1} parent=5 // pred_fallthru
        _
    $region6: #{tpu_custom_call.1} parent=1 // loop_footer
      %s21 = sadd.s32 1, %s17
    $region7: #{tpu_custom_call.1} parent=1 // loop_footer_branch
      %16 = sbr.rel target = $region3
    $region8: #{tpu_custom_call.1} parent=1 // loop_exit
      _
    %350 = vsyncpa [#allocation3], 1
    %s351 = scalar_lea.sflag [#allocation3], 1
    %352 = vsyncpa %s351, 1
    %353 = vsyncpa [#allocation4], 1
    %s354 = scalar_lea.sflag [#allocation4], 1
    %355 = vsyncpa %s354, 1
    %356 = vsyncpa [#allocation5], 1
    %s357 = scalar_lea.sflag [#allocation5], 1
    %358 = vsyncpa %s357, 1
    %359 = vsyncpa [#allocation6], 1
    %s360 = scalar_lea.sflag [#allocation6], 1
    %361 = vsyncpa %s360, 1

</llo_original>
